<compile_context>
chip_gen: v5e
topology: v5e:2x2
jax: 0.10.0
libtpu: 0.0.40
codegen_flags: <defaults>
</compile_context>

<pallas_src>
import functools

import jax
import jax.numpy as jnp
from jax import lax
from jax.experimental import pallas as pl
from jax.experimental.pallas import tpu as pltpu

K = 9        # Conv1d kernel size
PAD = 1      # Conv1d padding
EPS = 1e-5   # BatchNorm eps
LANE = 128


def _round_up(x, m):
    return (x + m - 1) // m * m


def _vmem_capacity_bytes():
    try:
        cap = getattr(pltpu.get_tpu_info(), "vmem_capacity_bytes", None)
        if cap:
            return int(cap)
    except Exception:
        pass
    return 64 * 1024 * 1024   # conservative fallback: v7x per-TensorCore VMEM


def _tile_vmem_bytes(cin, cout, tw, mxu_bytes):
    """Rough per-tile resident bytes: double-buffered ins/outs + scratch + temporaries."""
    f32 = 4
    p1 = (2 * cin * (tw + LANE) * mxu_bytes      # x main + halo (double buffered)
          + cout * K * cin * mxu_bytes           # w1 (resident)
          + 2 * tw * f32                         # mask row
          + K * cin * tw * mxu_bytes             # im2col scratch
          + 2 * cout * tw * f32                  # y1 output (double buffered)
          + 4 * cout * tw * f32)                 # (Cout, tw) elementwise temporaries
    p2 = (2 * cout * (tw + LANE) * f32           # y1 main + halo (double buffered)
          + cout * K * cout * mxu_bytes          # w2
          + 6 * tw * f32                         # mask rows
          + K * cout * tw * mxu_bytes            # im2col scratch
          + 2 * cout * tw * f32                  # y2 output (double buffered)
          + 6 * cout * tw * f32)                 # elementwise temporaries
    return max(p1, p2)


def _pick_tile_width(w_total, cin, cout, mxu_bytes, budget, tile_width=None):
    if tile_width is not None:
        assert tile_width % LANE == 0 and w_total % tile_width == 0, (tile_width, w_total)
        return tile_width
    for cand in range(min(w_total, 2048), LANE - 1, -LANE):
        if w_total % cand == 0 and _tile_vmem_bytes(cin, cout, cand, mxu_bytes) <= budget:
            return cand
    return LANE


# ----------------------------- kernels -----------------------------

def _conv1_stats_kernel(x_ref, xh_ref, w_ref, m1_ref, y_ref, s_ref, q_ref, a_ref,
                        *, cin, tw):
    # im2col: fold the 9 taps into the contraction; the halo block supplies the last cols.
    a_ref[0:cin, :] = x_ref[...]
    for k in range(1, K):
        a_ref[k * cin:(k + 1) * cin, :tw - k] = x_ref[:, k:]
        a_ref[k * cin:(k + 1) * cin, tw - k:] = xh_ref[:, :k]
    y = jnp.dot(w_ref[...], a_ref[...], preferred_element_type=jnp.float32)
    y_ref[...] = y
    ym = jnp.where(m1_ref[...] > 0.5, y, 0.0)          # select (not *): NaN-safe masking
    s_ref[0] = jnp.sum(ym, axis=1, keepdims=True)       # per-tile BN1 partials
    q_ref[0] = jnp.sum(ym * ym, axis=1, keepdims=True)


def _bn1_conv2_stats_kernel(y1_ref, y1h_ref, m1_ref, m1h_ref, m2_ref, w_ref,
                            sc_ref, sh_ref, y2_ref, s_ref, q_ref, a_ref,
                            *, cout, tw, mxu_dtype):
    sc = sc_ref[...]
    sh = sh_ref[...]
    # BN1 + ReLU applied on the fly (f32 math); guard columns zeroed so the result IS
    # conv2's halo-padded, guard-separated input slab. Cast to the MXU operand dtype.
    h = jnp.where(m1_ref[...] > 0.5,
                  jnp.maximum(y1_ref[...] * sc + sh, 0.0), 0.0).astype(mxu_dtype)
    hh = jnp.where(m1h_ref[:, :K - 1] > 0.5,
                   jnp.maximum(y1h_ref[:, :K - 1] * sc + sh, 0.0), 0.0).astype(mxu_dtype)
    a_ref[0:cout, :] = h
    for k in range(1, K):
        a_ref[k * cout:(k + 1) * cout, :tw - k] = h[:, k:]
        a_ref[k * cout:(k + 1) * cout, tw - k:] = hh[:, :k]
    y2 = jnp.dot(w_ref[...], a_ref[...], preferred_element_type=jnp.float32)
    y2_ref[...] = y2
    ym = jnp.where(m2_ref[...] > 0.5, y2, 0.0)
    s_ref[0] = jnp.sum(ym, axis=1, keepdims=True)        # per-tile BN2 partials
    q_ref[0] = jnp.sum(ym * ym, axis=1, keepdims=True)


def _bn_relu_kernel(y_ref, sc_ref, sh_ref, o_ref):
    o_ref[...] = jnp.maximum(y_ref[...] * sc_ref[...] + sh_ref[...], 0.0).astype(o_ref.dtype)


# ----------------------------- wrapper -----------------------------

def double_conv_forward(x, params, *, mxu_dtype=jnp.bfloat16, tile_width=None):
    """x: (N, Cin, L) -> (N, Cout, L - 12). Train-mode BN stats (PyTorch forward())."""
    n, cin, l = x.shape
    cout = params["w1"].shape[1]
    l1 = l + 2 * PAD - K + 1
    l2 = l1 + 2 * PAD - K + 1
    assert l2 > 0, "input length too small for two k=9, pad=1 convs"

    seg = max(LANE, _round_up(l + 2 * PAD, LANE))   # per-batch lane segment (>= L + 2)
    w_total = n * seg                               # lane-dense slab width (128-multiple)
    wx = w_total + LANE                             # + halo / guard tail

    mxu_bytes = 2 if mxu_dtype == jnp.bfloat16 else 4
    cap = _vmem_capacity_bytes()
    budget = max(4 << 20, min(24 << 20, int(0.3 * cap)))
    tw = _pick_tile_width(w_total, cin, cout, mxu_bytes, budget, tile_width)
    g = w_total // tw
    tpl = tw // LANE
    est = _tile_vmem_bytes(cin, cout, tw, mxu_bytes)
    vmem_limit = int(min(int(0.9 * cap), max(4 * est, 32 << 20)))
    cparams = pltpu.CompilerParams(dimension_semantics=("parallel",),
                                   vmem_limit_bytes=vmem_limit)
    f32 = jnp.float32

    # Guard-separated input slab: batch b's data at columns b*seg + 2 + m (m < L).
    # The 2 left guard zeros give conv1's pad=1 plus the +1 shift that makes BN1's output
    # columns line up as conv2's already halo-padded input.
    xs = jnp.transpose(x.astype(mxu_dtype), (1, 0, 2))                 # (Cin, N, L)
    xs = jnp.pad(xs, ((0, 0), (0, 0), (PAD + 1, seg - l - PAD - 1)))   # (Cin, N, seg)
    x_slab = jnp.pad(xs.reshape(cin, w_total), ((0, 0), (0, LANE)))    # (Cin, wx)

    # im2col weight layout (row k*C + c); conv biases dropped (no-ops before train BN).
    w1_2d = jnp.transpose(params["w1"], (1, 0, 2)).reshape(cout, K * cin).astype(mxu_dtype)
    w2_2d = jnp.transpose(params["w2"], (1, 0, 2)).reshape(cout, K * cout).astype(mxu_dtype)

    # Precomputed 0/1 valid-column rows (no per-lane integer modulo in-kernel).
    col = jnp.arange(wx, dtype=jnp.int32)
    b_idx = col // seg
    pos = col - b_idx * seg
    in_batch = b_idx < n
    m1 = (in_batch & (pos >= 1) & (pos <= l1)).astype(f32)[None, :]    # conv1 outputs
    m2 = (in_batch & (pos < l2)).astype(f32)[None, :]                  # conv2 outputs

    # ---- pass 1: conv1 + per-tile BN1 partial stats ----
    y1, s1p, q1p = pl.pallas_call(
        functools.partial(_conv1_stats_kernel, cin=cin, tw=tw),
        grid=(g,),
        in_specs=[
            pl.BlockSpec((cin, tw), lambda i: (0, i)),                  # x main tile
            pl.BlockSpec((cin, LANE), lambda i: (0, (i + 1) * tpl)),    # x halo (next 128)
            pl.BlockSpec((cout, K * cin), lambda i: (0, 0)),            # w1 (resident)
            pl.BlockSpec((1, tw), lambda i: (0, i)),                    # mask1
        ],
        out_specs=[
            pl.BlockSpec((cout, tw), lambda i: (0, i)),                 # y1 (pre-BN)
            pl.BlockSpec((1, cout, 1), lambda i: (i, 0, 0)),            # per-tile sum
            pl.BlockSpec((1, cout, 1), lambda i: (i, 0, 0)),            # per-tile sumsq
        ],
        out_shape=[jax.ShapeDtypeStruct((cout, wx), f32),
                   jax.ShapeDtypeStruct((g, cout, 1), f32),
                   jax.ShapeDtypeStruct((g, cout, 1), f32)],
        scratch_shapes=[pltpu.VMEM((K * cin, tw), mxu_dtype)],
        compiler_params=cparams,
    )(x_slab, x_slab, w1_2d, m1)

    # BN1 batch stats folded into per-channel scale/shift (tiny jnp math).
    mean1 = jnp.sum(s1p, axis=0)[:, 0] / (n * l1)
    var1 = jnp.sum(q1p, axis=0)[:, 0] / (n * l1) - mean1 * mean1
    inv1 = lax.rsqrt(var1 + EPS) * params["g1"][:, 0]
    scale1 = inv1.reshape(cout, 1).astype(f32)
    shift1 = (params["be1"][:, 0] - mean1 * inv1).reshape(cout, 1).astype(f32)

    # ---- pass 2: BN1+ReLU on overlapped y1 tiles -> conv2 + per-tile BN2 partials ----
    y2, s2p, q2p = pl.pallas_call(
        functools.partial(_bn1_conv2_stats_kernel, cout=cout, tw=tw, mxu_dtype=mxu_dtype),
        grid=(g,),
        in_specs=[
            pl.BlockSpec((cout, tw), lambda i: (0, i)),                 # y1 main
            pl.BlockSpec((cout, LANE), lambda i: (0, (i + 1) * tpl)),   # y1 halo
            pl.BlockSpec((1, tw), lambda i: (0, i)),                    # mask1 main
            pl.BlockSpec((1, LANE), lambda i: (0, (i + 1) * tpl)),      # mask1 halo
            pl.BlockSpec((1, tw), lambda i: (0, i)),                    # mask2
            pl.BlockSpec((cout, K * cout), lambda i: (0, 0)),           # w2 (resident)
            pl.BlockSpec((cout, 1), lambda i: (0, 0)),                  # BN1 scale
            pl.BlockSpec((cout, 1), lambda i: (0, 0)),                  # BN1 shift
        ],
        out_specs=[
            pl.BlockSpec((cout, tw), lambda i: (0, i)),
            pl.BlockSpec((1, cout, 1), lambda i: (i, 0, 0)),
            pl.BlockSpec((1, cout, 1), lambda i: (i, 0, 0)),
        ],
        out_shape=[jax.ShapeDtypeStruct((cout, w_total), f32),
                   jax.ShapeDtypeStruct((g, cout, 1), f32),
                   jax.ShapeDtypeStruct((g, cout, 1), f32)],
        scratch_shapes=[pltpu.VMEM((K * cout, tw), mxu_dtype)],
        compiler_params=cparams,
    )(y1, y1, m1, m1, m2, w2_2d, scale1, shift1)

    mean2 = jnp.sum(s2p, axis=0)[:, 0] / (n * l2)
    var2 = jnp.sum(q2p, axis=0)[:, 0] / (n * l2) - mean2 * mean2
    inv2 = lax.rsqrt(var2 + EPS) * params["g2"][:, 0]
    scale2 = inv2.reshape(cout, 1).astype(f32)
    shift2 = (params["be2"][:, 0] - mean2 * inv2).reshape(cout, 1).astype(f32)

    # ---- pass 3: BN2 + ReLU, lane-dense elementwise tiles ----
    out2d = pl.pallas_call(
        _bn_relu_kernel,
        grid=(g,),
        in_specs=[
            pl.BlockSpec((cout, tw), lambda i: (0, i)),
            pl.BlockSpec((cout, 1), lambda i: (0, 0)),
            pl.BlockSpec((cout, 1), lambda i: (0, 0)),
        ],
        out_specs=pl.BlockSpec((cout, tw), lambda i: (0, i)),
        out_shape=jax.ShapeDtypeStruct((cout, w_total), f32),
        compiler_params=cparams,
    )(y2, scale2, shift2)

    # Cut each batch's valid L2 columns out of the lane-dense slab.
    out = jnp.transpose(out2d.reshape(cout, n, seg), (1, 0, 2))[:, :, :l2]
    return out.astype(x.dtype)


# ---------------- pure-JAX reference (for validation) ----------------

def _bn_relu_ref(h, gamma, beta):
    mean = jnp.mean(h, axis=(0, 2), keepdims=True)
    var = jnp.mean((h - mean) ** 2, axis=(0, 2), keepdims=True)
    hn = (h - mean) * lax.rsqrt(var + EPS)
    return jnp.maximum(hn * gamma[None, :, :] + beta[None, :, :], 0.0)


def double_conv_reference(x, params):
    def conv(x, wgt, b):                       # wgt: (K, Cout, Cin_) -> OIH
        w_oih = jnp.transpose(wgt, (1, 2, 0))
        y = lax.conv_general_dilated(x, w_oih, window_strides=(1,),
                                     padding=[(PAD, PAD)],
                                     dimension_numbers=("NCH", "OIH", "NCH"))
        return y + b[None, :, :]
    h = _bn_relu_ref(conv(x, params["w1"], params["b1"]), params["g1"], params["be1"])
    h = _bn_relu_ref(conv(h, params["w2"], params["b2"]), params["g2"], params["be2"])
    return h


def init_params(key, in_ch, out_ch):
    k1, k2, k3, k4 = jax.random.split(key, 4)
    bound1 = 1.0 / (in_ch * K) ** 0.5          # PyTorch Conv1d-style uniform init bounds
    bound2 = 1.0 / (out_ch * K) ** 0.5
    return {
        "w1": jax.random.uniform(k1, (K, out_ch, in_ch), jnp.float32, -bound1, bound1),
        "b1": jax.random.uniform(k2, (out_ch, 1), jnp.float32, -bound1, bound1),
        "g1": jnp.ones((out_ch, 1), jnp.float32),
        "be1": jnp.zeros((out_ch, 1), jnp.float32),
        "w2": jax.random.uniform(k3, (K, out_ch, out_ch), jnp.float32, -bound2, bound2),
        "b2": jax.random.uniform(k4, (out_ch, 1), jnp.float32, -bound2, bound2),
        "g2": jnp.ones((out_ch, 1), jnp.float32),
        "be2": jnp.zeros((out_ch, 1), jnp.float32),
    }


if __name__ == "__main__":
    N, IN_CH, OUT_CH, L = 2, 4, 8, 32

    key = jax.random.PRNGKey(0)
    kx, kp = jax.random.split(key)
    x = jax.random.normal(kx, (N, IN_CH, L), jnp.float32)
    params = init_params(kp, IN_CH, OUT_CH)

    ref = jax.block_until_ready(double_conv_reference(x, params))

    # f32 MXU operands + forced 128-wide tiles: exercises the multi-tile partial-stat
    # path and holds the strict 1e-4 tolerance.
    out = jax.block_until_ready(
        double_conv_forward(x, params, mxu_dtype=jnp.float32, tile_width=128))
    assert out.shape == (N, OUT_CH, L - 12), out.shape
    assert jnp.allclose(out, ref, atol=1e-4, rtol=1e-4), float(jnp.max(jnp.abs(out - ref)))

    # bf16 MXU operands (production path for v5e/v6e/v7x), f32 accumulation + f32 BN math.
    out_bf16 = jax.block_until_ready(double_conv_forward(x, params, mxu_dtype=jnp.bfloat16))
    assert out_bf16.shape == (N, OUT_CH, L - 12), out_bf16.shape
    assert jnp.allclose(out_bf16, ref, atol=1e-1, rtol=1e-1), \
        float(jnp.max(jnp.abs(out_bf16 - ref)))

    print("KERNEL_OK")
</pallas_src>

<mosaic_0001>
module attributes {stable_mosaic.version = 11 : i64} {
  func.func @_conv1_stats_kernel(%arg0: i32, %arg1: memref<4x128xf32, #tpu.memory_space<vmem>>, %arg2: memref<4x128xf32, #tpu.memory_space<vmem>>, %arg3: memref<8x36xf32, #tpu.memory_space<vmem>>, %arg4: memref<1x128xf32, #tpu.memory_space<vmem>>, %arg5: memref<8x128xf32, #tpu.memory_space<vmem>>, %arg6: memref<1x8x1xf32, #tpu.memory_space<vmem>>, %arg7: memref<1x8x1xf32, #tpu.memory_space<vmem>>, %arg8: memref<36x128xf32, #tpu.memory_space<vmem>>) attributes {dimension_semantics = [#tpu.dimension_semantics<parallel>], iteration_bounds = array<i64: 2>, scalar_prefetch = 0 : i64, scratch_operands = 1 : i64, tpu.core_type = #tpu.core_type<tc>, window_params = [{transform_indices = @transform_0, window_bounds = array<i64: 4, 128>}, {transform_indices = @transform_1, window_bounds = array<i64: 4, 128>}, {pipeline_mode = #tpu.pipeline_mode<synchronous>, transform_indices = @transform_2, window_bounds = array<i64: 8, 36>}, {transform_indices = @transform_3, window_bounds = array<i64: 1, 128>}, {transform_indices = @transform_4, window_bounds = array<i64: 8, 128>}, {transform_indices = @transform_5, window_bounds = array<i64: 1, 8, 1>}, {transform_indices = @transform_6, window_bounds = array<i64: 1, 8, 1>}]} {
    %c0 = arith.constant 0 : index
    %c0_0 = arith.constant 0 : index
    %0 = vector.load %arg1[%c0, %c0_0] : memref<4x128xf32, #tpu.memory_space<vmem>>, vector<4x128xf32>
    %c0_1 = arith.constant 0 : index
    %c0_2 = arith.constant 0 : index
    %1 = vector.load %arg8[%c0_1, %c0_2] : memref<36x128xf32, #tpu.memory_space<vmem>>, vector<4x128xf32>
    tpu.vector_store %arg8[%c0_1, %c0_2], %0 {strides = array<i32>} : memref<36x128xf32, #tpu.memory_space<vmem>>, vector<4x128xf32>,
    %c0_3 = arith.constant 0 : index
    %c1 = arith.constant 1 : index
    %2 = vector.load %arg1[%c0_3, %c1] : memref<4x128xf32, #tpu.memory_space<vmem>>, vector<4x127xf32>
    %c4 = arith.constant 4 : index
    %c0_4 = arith.constant 0 : index
    %3 = vector.load %arg8[%c4, %c0_4] : memref<36x128xf32, #tpu.memory_space<vmem>>, vector<4x127xf32>
    tpu.vector_store %arg8[%c4, %c0_4], %2 {strides = array<i32>} : memref<36x128xf32, #tpu.memory_space<vmem>>, vector<4x127xf32>,
    %c0_5 = arith.constant 0 : index
    %c0_6 = arith.constant 0 : index
    %4 = vector.load %arg2[%c0_5, %c0_6] : memref<4x128xf32, #tpu.memory_space<vmem>>, vector<4x1xf32>
    %c4_7 = arith.constant 4 : index
    %c127 = arith.constant 127 : index
    %5 = vector.load %arg8[%c4_7, %c127] : memref<36x128xf32, #tpu.memory_space<vmem>>, vector<4x1xf32>
    tpu.vector_store %arg8[%c4_7, %c127], %4 {strides = array<i32>} : memref<36x128xf32, #tpu.memory_space<vmem>>, vector<4x1xf32>,
    %c0_8 = arith.constant 0 : index
    %c2 = arith.constant 2 : index
    %6 = vector.load %arg1[%c0_8, %c2] : memref<4x128xf32, #tpu.memory_space<vmem>>, vector<4x126xf32>
    %c8 = arith.constant 8 : index
    %c0_9 = arith.constant 0 : index
    %7 = vector.load %arg8[%c8, %c0_9] : memref<36x128xf32, #tpu.memory_space<vmem>>, vector<4x126xf32>
    tpu.vector_store %arg8[%c8, %c0_9], %6 {strides = array<i32>} : memref<36x128xf32, #tpu.memory_space<vmem>>, vector<4x126xf32>,
    %c0_10 = arith.constant 0 : index
    %c0_11 = arith.constant 0 : index
    %8 = vector.load %arg2[%c0_10, %c0_11] : memref<4x128xf32, #tpu.memory_space<vmem>>, vector<4x2xf32>
    %c8_12 = arith.constant 8 : index
    %c126 = arith.constant 126 : index
    %9 = vector.load %arg8[%c8_12, %c126] : memref<36x128xf32, #tpu.memory_space<vmem>>, vector<4x2xf32>
    tpu.vector_store %arg8[%c8_12, %c126], %8 {strides = array<i32>} : memref<36x128xf32, #tpu.memory_space<vmem>>, vector<4x2xf32>,
    %c0_13 = arith.constant 0 : index
    %c3 = arith.constant 3 : index
    %10 = vector.load %arg1[%c0_13, %c3] : memref<4x128xf32, #tpu.memory_space<vmem>>, vector<4x125xf32>
    %c12 = arith.constant 12 : index
    %c0_14 = arith.constant 0 : index
    %11 = vector.load %arg8[%c12, %c0_14] : memref<36x128xf32, #tpu.memory_space<vmem>>, vector<4x125xf32>
    tpu.vector_store %arg8[%c12, %c0_14], %10 {strides = array<i32>} : memref<36x128xf32, #tpu.memory_space<vmem>>, vector<4x125xf32>,
    %c0_15 = arith.constant 0 : index
    %c0_16 = arith.constant 0 : index
    %12 = vector.load %arg2[%c0_15, %c0_16] : memref<4x128xf32, #tpu.memory_space<vmem>>, vector<4x3xf32>
    %c12_17 = arith.constant 12 : index
    %c125 = arith.constant 125 : index
    %13 = vector.load %arg8[%c12_17, %c125] : memref<36x128xf32, #tpu.memory_space<vmem>>, vector<4x3xf32>
    tpu.vector_store %arg8[%c12_17, %c125], %12 {strides = array<i32>} : memref<36x128xf32, #tpu.memory_space<vmem>>, vector<4x3xf32>,
    %c0_18 = arith.constant 0 : index
    %c4_19 = arith.constant 4 : index
    %14 = vector.load %arg1[%c0_18, %c4_19] : memref<4x128xf32, #tpu.memory_space<vmem>>, vector<4x124xf32>
    %c16 = arith.constant 16 : index
    %c0_20 = arith.constant 0 : index
    %15 = vector.load %arg8[%c16, %c0_20] : memref<36x128xf32, #tpu.memory_space<vmem>>, vector<4x124xf32>
    tpu.vector_store %arg8[%c16, %c0_20], %14 {strides = array<i32>} : memref<36x128xf32, #tpu.memory_space<vmem>>, vector<4x124xf32>,
    %c0_21 = arith.constant 0 : index
    %c0_22 = arith.constant 0 : index
    %16 = vector.load %arg2[%c0_21, %c0_22] : memref<4x128xf32, #tpu.memory_space<vmem>>, vector<4x4xf32>
    %c16_23 = arith.constant 16 : index
    %c124 = arith.constant 124 : index
    %17 = vector.load %arg8[%c16_23, %c124] : memref<36x128xf32, #tpu.memory_space<vmem>>, vector<4x4xf32>
    tpu.vector_store %arg8[%c16_23, %c124], %16 {strides = array<i32>} : memref<36x128xf32, #tpu.memory_space<vmem>>, vector<4x4xf32>,
    %c0_24 = arith.constant 0 : index
    %c5 = arith.constant 5 : index
    %18 = vector.load %arg1[%c0_24, %c5] : memref<4x128xf32, #tpu.memory_space<vmem>>, vector<4x123xf32>
    %c20 = arith.constant 20 : index
    %c0_25 = arith.constant 0 : index
    %19 = vector.load %arg8[%c20, %c0_25] : memref<36x128xf32, #tpu.memory_space<vmem>>, vector<4x123xf32>
    tpu.vector_store %arg8[%c20, %c0_25], %18 {strides = array<i32>} : memref<36x128xf32, #tpu.memory_space<vmem>>, vector<4x123xf32>,
    %c0_26 = arith.constant 0 : index
    %c0_27 = arith.constant 0 : index
    %20 = vector.load %arg2[%c0_26, %c0_27] : memref<4x128xf32, #tpu.memory_space<vmem>>, vector<4x5xf32>
    %c20_28 = arith.constant 20 : index
    %c123 = arith.constant 123 : index
    %21 = vector.load %arg8[%c20_28, %c123] : memref<36x128xf32, #tpu.memory_space<vmem>>, vector<4x5xf32>
    tpu.vector_store %arg8[%c20_28, %c123], %20 {strides = array<i32>} : memref<36x128xf32, #tpu.memory_space<vmem>>, vector<4x5xf32>,
    %c0_29 = arith.constant 0 : index
    %c6 = arith.constant 6 : index
    %22 = vector.load %arg1[%c0_29, %c6] : memref<4x128xf32, #tpu.memory_space<vmem>>, vector<4x122xf32>
    %c24 = arith.constant 24 : index
    %c0_30 = arith.constant 0 : index
    %23 = vector.load %arg8[%c24, %c0_30] : memref<36x128xf32, #tpu.memory_space<vmem>>, vector<4x122xf32>
    tpu.vector_store %arg8[%c24, %c0_30], %22 {strides = array<i32>} : memref<36x128xf32, #tpu.memory_space<vmem>>, vector<4x122xf32>,
    %c0_31 = arith.constant 0 : index
    %c0_32 = arith.constant 0 : index
    %24 = vector.load %arg2[%c0_31, %c0_32] : memref<4x128xf32, #tpu.memory_space<vmem>>, vector<4x6xf32>
    %c24_33 = arith.constant 24 : index
    %c122 = arith.constant 122 : index
    %25 = vector.load %arg8[%c24_33, %c122] : memref<36x128xf32, #tpu.memory_space<vmem>>, vector<4x6xf32>
    tpu.vector_store %arg8[%c24_33, %c122], %24 {strides = array<i32>} : memref<36x128xf32, #tpu.memory_space<vmem>>, vector<4x6xf32>,
    %c0_34 = arith.constant 0 : index
    %c7 = arith.constant 7 : index
    %26 = vector.load %arg1[%c0_34, %c7] : memref<4x128xf32, #tpu.memory_space<vmem>>, vector<4x121xf32>
    %c28 = arith.constant 28 : index
    %c0_35 = arith.constant 0 : index
    %27 = vector.load %arg8[%c28, %c0_35] : memref<36x128xf32, #tpu.memory_space<vmem>>, vector<4x121xf32>
    tpu.vector_store %arg8[%c28, %c0_35], %26 {strides = array<i32>} : memref<36x128xf32, #tpu.memory_space<vmem>>, vector<4x121xf32>,
    %c0_36 = arith.constant 0 : index
    %c0_37 = arith.constant 0 : index
    %28 = vector.load %arg2[%c0_36, %c0_37] : memref<4x128xf32, #tpu.memory_space<vmem>>, vector<4x7xf32>
    %c28_38 = arith.constant 28 : index
    %c121 = arith.constant 121 : index
    %29 = vector.load %arg8[%c28_38, %c121] : memref<36x128xf32, #tpu.memory_space<vmem>>, vector<4x7xf32>
    tpu.vector_store %arg8[%c28_38, %c121], %28 {strides = array<i32>} : memref<36x128xf32, #tpu.memory_space<vmem>>, vector<4x7xf32>,
    %c0_39 = arith.constant 0 : index
    %c8_40 = arith.constant 8 : index
    %30 = vector.load %arg1[%c0_39, %c8_40] : memref<4x128xf32, #tpu.memory_space<vmem>>, vector<4x120xf32>
    %c32 = arith.constant 32 : index
    %c0_41 = arith.constant 0 : index
    %31 = vector.load %arg8[%c32, %c0_41] : memref<36x128xf32, #tpu.memory_space<vmem>>, vector<4x120xf32>
    tpu.vector_store %arg8[%c32, %c0_41], %30 {strides = array<i32>} : memref<36x128xf32, #tpu.memory_space<vmem>>, vector<4x120xf32>,
    %c0_42 = arith.constant 0 : index
    %c0_43 = arith.constant 0 : index
    %32 = vector.load %arg2[%c0_42, %c0_43] : memref<4x128xf32, #tpu.memory_space<vmem>>, vector<4x8xf32>
    %c32_44 = arith.constant 32 : index
    %c120 = arith.constant 120 : index
    %33 = vector.load %arg8[%c32_44, %c120] : memref<36x128xf32, #tpu.memory_space<vmem>>, vector<4x8xf32>
    tpu.vector_store %arg8[%c32_44, %c120], %32 {strides = array<i32>} : memref<36x128xf32, #tpu.memory_space<vmem>>, vector<4x8xf32>,
    %c0_45 = arith.constant 0 : index
    %c0_46 = arith.constant 0 : index
    %34 = vector.load %arg3[%c0_45, %c0_46] : memref<8x36xf32, #tpu.memory_space<vmem>>, vector<8x36xf32>
    %c0_47 = arith.constant 0 : index
    %c0_48 = arith.constant 0 : index
    %35 = vector.load %arg8[%c0_47, %c0_48] : memref<36x128xf32, #tpu.memory_space<vmem>>, vector<36x128xf32>
    %cst = arith.constant dense<0.000000e+00> : vector<8x128xf32>
    %36 = tpu.matmul %34, %35, %cst {dimension_numbers = #tpu.dot_dimension_numbers<[1], [0], [0], [1], [0, 0, 1, 1], [], []>} : vector<8x36xf32>, vector<36x128xf32>, vector<8x128xf32> -> vector<8x128xf32>
    %c0_49 = arith.constant 0 : index
    %c0_50 = arith.constant 0 : index
    %37 = vector.load %arg5[%c0_49, %c0_50] : memref<8x128xf32, #tpu.memory_space<vmem>>, vector<8x128xf32>
    tpu.vector_store %arg5[%c0_49, %c0_50], %36 {strides = array<i32>} : memref<8x128xf32, #tpu.memory_space<vmem>>, vector<8x128xf32>,
    %c0_51 = arith.constant 0 : index
    %c0_52 = arith.constant 0 : index
    %38 = vector.load %arg4[%c0_51, %c0_52] : memref<1x128xf32, #tpu.memory_space<vmem>>, vector<1x128xf32>
    %cst_53 = arith.constant 5.000000e-01 : f32
    %39 = vector.broadcast %cst_53 : f32 to vector<1x128xf32>
    %40 = arith.cmpf ogt, %38, %39 : vector<1x128xf32>
    %cst_54 = arith.constant 0.000000e+00 : f32
    %41 = vector.shape_cast %40 : vector<1x128xi1> to vector<1x128xi1>
    %42 = vector.broadcast %41 : vector<1x128xi1> to vector<8x128xi1>
    %43 = vector.broadcast %cst_54 : f32 to vector<8x128xf32>
    %44 = arith.select %42, %36, %43 : vector<8x128xi1>, vector<8x128xf32>
    %cst_55 = arith.constant dense<0.000000e+00> : vector<8xf32>
    %45 = vector.multi_reduction <add>, %44, %cst_55 [1] : vector<8x128xf32> to vector<8xf32>
    %46 = vector.shape_cast %45 : vector<8xf32> to vector<8x1xf32>
    %c0_56 = arith.constant 0 : index
    %c0_57 = arith.constant 0 : index
    %c0_58 = arith.constant 0 : index
    %47 = vector.load %arg6[%c0_56, %c0_57, %c0_58] : memref<1x8x1xf32, #tpu.memory_space<vmem>>, vector<1x8x1xf32>
    %48 = vector.shape_cast %47 : vector<1x8x1xf32> to vector<8x1xf32>
    %49 = vector.shape_cast %46 : vector<8x1xf32> to vector<1x8x1xf32>
    tpu.vector_store %arg6[%c0_56, %c0_57, %c0_58], %49 {strides = array<i32>} : memref<1x8x1xf32, #tpu.memory_space<vmem>>, vector<1x8x1xf32>,
    %50 = arith.mulf %44, %44 : vector<8x128xf32>
    %cst_59 = arith.constant dense<0.000000e+00> : vector<8xf32>
    %51 = vector.multi_reduction <add>, %50, %cst_59 [1] : vector<8x128xf32> to vector<8xf32>
    %52 = vector.shape_cast %51 : vector<8xf32> to vector<8x1xf32>
    %c0_60 = arith.constant 0 : index
    %c0_61 = arith.constant 0 : index
    %c0_62 = arith.constant 0 : index
    %53 = vector.load %arg7[%c0_60, %c0_61, %c0_62] : memref<1x8x1xf32, #tpu.memory_space<vmem>>, vector<1x8x1xf32>
    %54 = vector.shape_cast %53 : vector<1x8x1xf32> to vector<8x1xf32>
    %55 = vector.shape_cast %52 : vector<8x1xf32> to vector<1x8x1xf32>
    tpu.vector_store %arg7[%c0_60, %c0_61, %c0_62], %55 {strides = array<i32>} : memref<1x8x1xf32, #tpu.memory_space<vmem>>, vector<1x8x1xf32>,
    return
  }
  func.func @transform_0(%arg0: i32) -> (i32, i32) {
    %c0_i32 = arith.constant 0 : i32
    %c0_i32_0 = arith.constant 0 : i32
    return %c0_i32, %arg0 : i32, i32
  }
  func.func @transform_1(%arg0: i32) -> (i32, i32) {
    %c1_i32 = arith.constant 1 : i32
    %0 = arith.addi %arg0, %c1_i32 : i32
    %c1_i32_0 = arith.constant 1 : i32
    %1 = arith.muli %0, %c1_i32_0 : i32
    %c0_i32 = arith.constant 0 : i32
    %c0_i32_1 = arith.constant 0 : i32
    return %c0_i32, %1 : i32, i32
  }
  func.func @transform_2(%arg0: i32) -> (i32, i32) {
    %c0_i32 = arith.constant 0 : i32
    %c0_i32_0 = arith.constant 0 : i32
    %c0_i32_1 = arith.constant 0 : i32
    return %c0_i32, %c0_i32_0 : i32, i32
  }
  func.func @transform_3(%arg0: i32) -> (i32, i32) {
    %c0_i32 = arith.constant 0 : i32
    %c0_i32_0 = arith.constant 0 : i32
    return %c0_i32, %arg0 : i32, i32
  }
  func.func @transform_4(%arg0: i32) -> (i32, i32) {
    %c0_i32 = arith.constant 0 : i32
    %c0_i32_0 = arith.constant 0 : i32
    return %c0_i32, %arg0 : i32, i32
  }
  func.func @transform_5(%arg0: i32) -> (i32, i32, i32) {
    %c0_i32 = arith.constant 0 : i32
    %c0_i32_0 = arith.constant 0 : i32
    %c0_i32_1 = arith.constant 0 : i32
    return %arg0, %c0_i32, %c0_i32_0 : i32, i32, i32
  }
  func.func @transform_6(%arg0: i32) -> (i32, i32, i32) {
    %c0_i32 = arith.constant 0 : i32
    %c0_i32_0 = arith.constant 0 : i32
    %c0_i32_1 = arith.constant 0 : i32
    return %arg0, %c0_i32, %c0_i32_0 : i32, i32, i32
  }
}

</mosaic_0001>

<llo_original>
// kernel: tpu_custom_call.1
$region0: #{tpu_custom_call.1}
  #allocation0 [shape = 'u32[]', space=smem, size = 0x4, offset = 0x4, fixed_abs, tag = 'smem constant byte address 0x4 - core index']
  #allocation1 [shape = 'u32[72,128]{1,0:T(1,128)}', space=vmem, size = 0x9000, scoped, tag = 'internal scratch']
  #allocation2 [shape = 'f32[36,128]{1,0:T(8,128)}', space=vmem, size = 0x5000, scoped, tag = 'scratch operand']
  %s0 = inlined_call_operand.hbm [shape: f32[4,384], index: 0, kind: input, shape index: {}]
  %s1 = inlined_call_operand.hbm [shape: f32[4,384], index: 1, kind: input, shape index: {}]
  %s2 = inlined_call_operand.hbm [shape: f32[8,36], index: 2, kind: input, shape index: {}]
  %s3 = inlined_call_operand.hbm [shape: f32[1,384], index: 3, kind: input, shape index: {}]
  %s4 = inlined_call_operand.hbm [shape: f32[8,384], index: 4, kind: output, shape index: {0}]
  %s5 = inlined_call_operand.vmem [shape: f32[2,8,1], index: 5, kind: output, shape index: {1}]
  %s6 = inlined_call_operand.vmem [shape: f32[2,8,1], index: 6, kind: output, shape index: {2}]
  %7 = xla_tuple %s4, %s5, %s6
  %s8 = sld [smem:[#allocation0]]
  $region81: #{tpu_custom_call.1} parent=0
    _
  %s10 = ssub.s32 1, %s8
  %s11 = scalar_select 0, %s10, %s8
  $region1: #{tpu_custom_call.1} parent=0
    #allocation3 [shape = 'u8[4096]{0}', space=vmem, size = 0x1000, scoped, tag = 'input window, operand 0']
    #allocation4 [shape = 's32[2]{0}', space=sflag, size = 0x8, scoped, tag = 'scoped memory for tpu_custom_call.1']
    #allocation5 [shape = 's32[2]{0}', space=sflag, size = 0x8, scoped, tag = 'scoped memory for tpu_custom_call.1']
    #allocation6 [shape = 'u8[4096]{0}', space=vmem, size = 0x1000, scoped, tag = 'input window, operand 1']
    #allocation7 [shape = 's32[2]{0}', space=sflag, size = 0x8, scoped, tag = 'scoped memory for tpu_custom_call.1']
    #allocation8 [shape = 'u8[4096]{0}', space=vmem, size = 0x1000, scoped, tag = 'input window, operand 2, single buffered']
    #allocation9 [shape = 'u8[1024]{0}', space=vmem, size = 0x400, scoped, tag = 'input window, operand 3']
    #allocation10 [shape = 's32[2]{0}', space=sflag, size = 0x8, scoped, tag = 'scoped memory for tpu_custom_call.1']
    #allocation11 [shape = 'u8[8192]{0}', space=vmem, size = 0x2000, scoped, tag = 'output window, operand 0']
    %12 = vsyncpa [#allocation4], 0
    %s13 = scalar_lea.sflag [#allocation4], 1
    %14 = vsyncpa %s13, 0
    %15 = vsyncpa [#allocation7], 0
    %s16 = scalar_lea.sflag [#allocation7], 1
    %17 = vsyncpa %s16, 0
    %18 = vsyncpa [#allocation10], 0
    %s19 = scalar_lea.sflag [#allocation10], 1
    %20 = vsyncpa %s19, 0
    %21 = vsyncpa [#allocation5], 0
    %s22 = scalar_lea.sflag [#allocation5], 1
    %23 = vsyncpa %s22, 0
    loop: start=0, step=1, limit=4
    $region2: #{tpu_custom_call.1} parent=1 // loop_pre_header
      _
    $region3: #{tpu_custom_call.1} parent=1 // loop_header
      %s25 = sphi 0, %s29
      %p26 = scmp.ge.s32.totalorder %s25, 4
      %s35 = sphi 0, %s37
      %s38 = sphi 0, %s35
      %s39 = sphi 0, %s38
      %s55 = sphi 0, %s39
      %s63 = sphi 0, %s65
      %s66 = sphi 0, %s63
      %s67 = sphi 0, %s66
      %s83 = sphi 0, %s67
      %s87 = sphi 0, %s87
      %s89 = sphi 0, %s87
      %s90 = sphi 0, %s89
      %s104 = sphi 0, %s90
      %s110 = sphi 0, %s112
      %s113 = sphi 0, %s110
      %s114 = sphi 0, %s113
      %s130 = sphi 0, %s114
      %s136 = sphi 0, %s138
      %s139 = sphi 0, %s136
      %s140 = sphi 0, %s139
      %s156 = sphi 0, %s140
      %s162 = sphi 0, %s164
      %s165 = sphi 0, %s162
      %s166 = sphi 0, %s165
      %s182 = sphi 0, %s166
      %s188 = sphi 0, %s190
      %s191 = sphi 0, %s188
      %s192 = sphi 0, %s191
      %s208 = sphi 0, %s192
    $region4: #{tpu_custom_call.1} parent=1 // loop_header_branch
      %28 = sbr.rel (%p26) target = $region8
    $region5: #{tpu_custom_call.1} parent=1 // loop_body
      %s30 = ssub.s32 %s25, 1
      %s31 = ssub.s32 %s25, 2
      %s32 = sadd.s32 %s25, 1
      %s33 = ssub.s32 %s25, %s32
      %p34 = scmp.eq.s32.totalorder %s33, 0
      %s36 = sadd.s32 %s35, 1
      %s37 = scalar_select %p34, %s35, %s36
      %p40 = pneg %p34
      %p41 = scmp.eq.s32.totalorder %s25, 1
      %p42 = por %p40, %p41
      %p43 = scmp.ne.s32.totalorder %s35, %s38
      %p44 = scmp.eq.s32.totalorder %s25, 0
      %p45 = por %p43, %p44
      %p46 = scmp.ne.s32.totalorder %s35, %s38
      %p47 = scmp.eq.s32.totalorder %s30, 1
      %p48 = por %p46, %p47
      %p49 = scmp.ne.s32.totalorder %s38, %s39
      %p50 = scmp.eq.s32.totalorder %s30, 0
      %p51 = por %p49, %p50
      %p52 = scmp.ne.s32.totalorder %s38, %s39
      %p53 = scmp.eq.s32.totalorder %s31, 1
      %p54 = por %p52, %p53
      %p56 = scmp.ne.s32.totalorder %s39, %s55
      %p57 = scmp.eq.s32.totalorder %s31, 0
      %p58 = por %p56, %p57
      %s59 = sadd.s32 %s25, 1
      %s60 = sadd.s32 %s32, 1
      %s61 = ssub.s32 %s59, %s60
      %p62 = scmp.eq.s32.totalorder %s61, 0
      %s64 = sadd.s32 %s63, 1
      %s65 = scalar_select %p62, %s63, %s64
      %p68 = pneg %p62
      %p69 = scmp.eq.s32.totalorder %s25, 1
      %p70 = por %p68, %p69
      %p71 = scmp.ne.s32.totalorder %s63, %s66
      %p72 = scmp.eq.s32.totalorder %s25, 0
      %p73 = por %p71, %p72
      %p74 = scmp.ne.s32.totalorder %s63, %s66
      %p75 = scmp.eq.s32.totalorder %s30, 1
      %p76 = por %p74, %p75
      %p77 = scmp.ne.s32.totalorder %s66, %s67
      %p78 = scmp.eq.s32.totalorder %s30, 0
      %p79 = por %p77, %p78
      %p80 = scmp.ne.s32.totalorder %s66, %s67
      %p81 = scmp.eq.s32.totalorder %s31, 1
      %p82 = por %p80, %p81
      %p84 = scmp.ne.s32.totalorder %s67, %s83
      %p85 = scmp.eq.s32.totalorder %s31, 0
      %p86 = por %p84, %p85
      %s88 = sadd.s32 %s87, 1
      %p91 = scmp.eq.s32.totalorder %s25, 1
      %p92 = scmp.ne.s32.totalorder %s87, %s89
      %p93 = scmp.eq.s32.totalorder %s25, 0
      %p94 = por %p92, %p93
      %p95 = scmp.ne.s32.totalorder %s87, %s89
      %p96 = scmp.eq.s32.totalorder %s30, 1
      %p97 = por %p95, %p96
      %p98 = scmp.ne.s32.totalorder %s89, %s90
      %p99 = scmp.eq.s32.totalorder %s30, 0
      %p100 = por %p98, %p99
      %p101 = scmp.ne.s32.totalorder %s89, %s90
      %p102 = scmp.eq.s32.totalorder %s31, 1
      %p103 = por %p101, %p102
      %p105 = scmp.ne.s32.totalorder %s90, %s104
      %p106 = scmp.eq.s32.totalorder %s31, 0
      %p107 = por %p105, %p106
      %s108 = ssub.s32 %s25, %s32
      %p109 = scmp.eq.s32.totalorder %s108, 0
      %s111 = sadd.s32 %s110, 1
      %s112 = scalar_select %p109, %s110, %s111
      %p115 = pneg %p109
      %p116 = scmp.eq.s32.totalorder %s25, 1
      %p117 = por %p115, %p116
      %p118 = scmp.ne.s32.totalorder %s110, %s113
      %p119 = scmp.eq.s32.totalorder %s25, 0
      %p120 = por %p118, %p119
      %p121 = scmp.ne.s32.totalorder %s110, %s113
      %p122 = scmp.eq.s32.totalorder %s30, 1
      %p123 = por %p121, %p122
      %p124 = scmp.ne.s32.totalorder %s113, %s114
      %p125 = scmp.eq.s32.totalorder %s30, 0
      %p126 = por %p124, %p125
      %p127 = scmp.ne.s32.totalorder %s113, %s114
      %p128 = scmp.eq.s32.totalorder %s31, 1
      %p129 = por %p127, %p128
      %p131 = scmp.ne.s32.totalorder %s114, %s130
      %p132 = scmp.eq.s32.totalorder %s31, 0
      %p133 = por %p131, %p132
      %s134 = ssub.s32 %s25, %s32
      %p135 = scmp.eq.s32.totalorder %s134, 0
      %s137 = sadd.s32 %s136, 1
      %s138 = scalar_select %p135, %s136, %s137
      %p141 = pneg %p135
      %p142 = scmp.eq.s32.totalorder %s25, 1
      %p143 = por %p141, %p142
      %p144 = scmp.ne.s32.totalorder %s136, %s139
      %p145 = scmp.eq.s32.totalorder %s25, 0
      %p146 = por %p144, %p145
      %p147 = scmp.ne.s32.totalorder %s136, %s139
      %p148 = scmp.eq.s32.totalorder %s30, 1
      %p149 = por %p147, %p148
      %p150 = scmp.ne.s32.totalorder %s139, %s140
      %p151 = scmp.eq.s32.totalorder %s30, 0
      %p152 = por %p150, %p151
      %p153 = scmp.ne.s32.totalorder %s139, %s140
      %p154 = scmp.eq.s32.totalorder %s31, 1
      %p155 = por %p153, %p154
      %p157 = scmp.ne.s32.totalorder %s140, %s156
      %p158 = scmp.eq.s32.totalorder %s31, 0
      %p159 = por %p157, %p158
      %s160 = ssub.s32 %s25, %s32
      %p161 = scmp.eq.s32.totalorder %s160, 0
      %s163 = sadd.s32 %s162, 1
      %s164 = scalar_select %p161, %s162, %s163
      %p167 = pneg %p161
      %p168 = scmp.eq.s32.totalorder %s25, 1
      %p169 = por %p167, %p168
      %p170 = scmp.ne.s32.totalorder %s162, %s165
      %p171 = scmp.eq.s32.totalorder %s25, 0
      %p172 = por %p170, %p171
      %p173 = scmp.ne.s32.totalorder %s162, %s165
      %p174 = scmp.eq.s32.totalorder %s30, 1
      %p175 = por %p173, %p174
      %p176 = scmp.ne.s32.totalorder %s165, %s166
      %p177 = scmp.eq.s32.totalorder %s30, 0
      %p178 = por %p176, %p177
      %p179 = scmp.ne.s32.totalorder %s165, %s166
      %p180 = scmp.eq.s32.totalorder %s31, 1
      %p181 = por %p179, %p180
      %p183 = scmp.ne.s32.totalorder %s166, %s182
      %p184 = scmp.eq.s32.totalorder %s31, 0
      %p185 = por %p183, %p184
      %s186 = ssub.s32 %s25, %s32
      %p187 = scmp.eq.s32.totalorder %s186, 0
      %s189 = sadd.s32 %s188, 1
      %s190 = scalar_select %p187, %s188, %s189
      %p193 = pneg %p187
      %p194 = scmp.eq.s32.totalorder %s25, 1
      %p195 = por %p193, %p194
      %p196 = scmp.ne.s32.totalorder %s188, %s191
      %p197 = scmp.eq.s32.totalorder %s25, 0
      %p198 = por %p196, %p197
      %p199 = scmp.ne.s32.totalorder %s188, %s191
      %p200 = scmp.eq.s32.totalorder %s30, 1
      %p201 = por %p199, %p200
      %p202 = scmp.ne.s32.totalorder %s191, %s192
      %p203 = scmp.eq.s32.totalorder %s30, 0
      %p204 = por %p202, %p203
      %p205 = scmp.ne.s32.totalorder %s191, %s192
      %p206 = scmp.eq.s32.totalorder %s31, 1
      %p207 = por %p205, %p206
      %p209 = scmp.ne.s32.totalorder %s192, %s208
      %p210 = scmp.eq.s32.totalorder %s31, 0
      %p211 = por %p209, %p210
      %p212 = scmp.le.s32.totalorder 1, %s25
      %p213 = scmp.lt.s32.totalorder %s25, 3
      %p214 = pnand %p212, %p213
      %p215 = pneg %p214
      // Predicated region
      $region9: #{tpu_custom_call.1} parent=5 // pred_check
        _
      $region10: #{tpu_custom_call.1} parent=5 // pred_check_branch
        %217 = sbr.rel (%p214) target = $region12
      $region11: #{tpu_custom_call.1} parent=5 // pred_region
        %s218 = ssub.s32 %s25, 1
        // Predicated region
        $region13: #{tpu_custom_call.1} parent=11 // pred_check
          %p219 = pneg %p100
        $region14: #{tpu_custom_call.1} parent=11 // pred_check_branch
          %221 = sbr.rel (%p219) target = $region16
        $region15: #{tpu_custom_call.1} parent=11 // pred_region
          %223 = vsyncadd [#allocation7], 0
          %s225 = sshll.u32 %s2, 4
          %s226 = int_to_ptr.hbm [resolvable:$true] %s225
          %s227 = sshll.u32 [#allocation8], 4
          %s228 = int_to_ptr.vmem [resolvable:$true] %s227
          %230 = dma.hbm_to_vmem [thread:$0]  %s226, 128, %s228, [#allocation7]
        $region16: #{tpu_custom_call.1} parent=11 // pred_fallthru
          _
      $region12: #{tpu_custom_call.1} parent=5 // pred_fallthru
        _
      %p231 = scmp.lt.s32.totalorder %s25, 2
      // Predicated region
      $region17: #{tpu_custom_call.1} parent=5 // pred_check
        %p232 = pneg %p231
      $region18: #{tpu_custom_call.1} parent=5 // pred_check_branch
        %234 = sbr.rel (%p232) target = $region20
      $region19: #{tpu_custom_call.1} parent=5 // pred_region
        // Predicated region
        $region21: #{tpu_custom_call.1} parent=19 // pred_check
          %p235 = pneg %p45
        $region22: #{tpu_custom_call.1} parent=19 // pred_check_branch
          %237 = sbr.rel (%p235) target = $region24
        $region23: #{tpu_custom_call.1} parent=19 // pred_region
          %s238 = sand.u32 %s35, 1
          %s239 = scalar_lea.sflag [#allocation4], %s238
          %s240 = sand.u32 %s35, 1
          %s241 = smul.addr %s240, 4
          %s242 = scalar_lea.vmem [#allocation3], %s241
          %244 = vsyncadd %s239, 0
          %s245 = smul.addr %s25, 4
          %s246 = scalar_lea.hbm %s0, %s245
          %s248 = sshll.u32 %s246, 4
          %s249 = int_to_ptr.hbm [resolvable:$true] %s248
          %s250 = sshll.u32 %s242, 4
          %s251 = int_to_ptr.vmem [resolvable:$true] %s250
          %253 = dma.hbm_to_vmem [thread:$0]  %s249, 64, %s251, %s239
        $region24: #{tpu_custom_call.1} parent=19 // pred_fallthru
          _
        // Predicated region
        $region25: #{tpu_custom_call.1} parent=19 // pred_check
          %p254 = pneg %p73
        $region26: #{tpu_custom_call.1} parent=19 // pred_check_branch
          %256 = sbr.rel (%p254) target = $region28
        $region27: #{tpu_custom_call.1} parent=19 // pred_region
          %s257 = sand.u32 %s25, 1
          %s258 = scalar_lea.sflag [#allocation7], %s257
          %s259 = sand.u32 %s63, 1
          %s260 = smul.addr %s259, 4
          %s261 = scalar_lea.vmem [#allocation6], %s260
          %s262 = sadd.s32 %s25, 1
          %264 = vsyncadd %s258, 0
          %s265 = smul.addr %s262, 4
          %s266 = scalar_lea.hbm %s1, %s265
          %s268 = sshll.u32 %s266, 4
          %s269 = int_to_ptr.hbm [resolvable:$true] %s268
          %s270 = sshll.u32 %s261, 4
          %s271 = int_to_ptr.vmem [resolvable:$true] %s270
          %273 = dma.hbm_to_vmem [thread:$0]  %s269, 64, %s271, %s258
        $region28: #{tpu_custom_call.1} parent=19 // pred_fallthru
          _
        // Predicated region
        $region29: #{tpu_custom_call.1} parent=19 // pred_check
          %p274 = pneg %p120
        $region30: #{tpu_custom_call.1} parent=19 // pred_check_branch
          %276 = sbr.rel (%p274) target = $region32
        $region31: #{tpu_custom_call.1} parent=19 // pred_region
          %s277 = sand.u32 %s110, 1
          %s278 = scalar_lea.sflag [#allocation10], %s277
          %s279 = sand.u32 %s110, 1
          %s280 = scalar_lea.vmem [#allocation9], %s279
          %282 = vsyncadd %s278, 0
          %s283 = scalar_lea.hbm %s3, %s25
          %s285 = sshll.u32 %s283, 4
          %s286 = int_to_ptr.hbm [resolvable:$true] %s285
          %s287 = sshll.u32 %s280, 4
          %s288 = int_to_ptr.vmem [resolvable:$true] %s287
          %290 = dma.hbm_to_vmem [thread:$0]  %s286, 16, %s288, %s278
        $region32: #{tpu_custom_call.1} parent=19 // pred_fallthru
          _
      $region20: #{tpu_custom_call.1} parent=5 // pred_fallthru
        _
      %p291 = scmp.le.s32.totalorder 1, %s25
      %p292 = scmp.lt.s32.totalorder %s25, 3
      %p293 = pnand %p291, %p292
      %p294 = pneg %p293
      // Predicated region
      $region33: #{tpu_custom_call.1} parent=5 // pred_check
        _
      $region34: #{tpu_custom_call.1} parent=5 // pred_check_branch
        %296 = sbr.rel (%p293) target = $region36
      $region35: #{tpu_custom_call.1} parent=5 // pred_region
        %s297 = ssub.s32 %s25, 1
        %s298 = sand.u32 %s38, 1
        %s299 = scalar_lea.sflag [#allocation4], %s298
        %s300 = sand.u32 %s38, 1
        %s301 = smul.addr %s300, 4
        %s302 = scalar_lea.vmem [#allocation3], %s301
        // Predicated region
        $region37: #{tpu_custom_call.1} parent=35 // pred_check
          %p303 = pneg %p51
        $region38: #{tpu_custom_call.1} parent=35 // pred_check_branch
          %305 = sbr.rel (%p303) target = $region40
        $region39: #{tpu_custom_call.1} parent=35 // pred_region
          %307 = dma.done %s299, 64
        $region40: #{tpu_custom_call.1} parent=35 // pred_fallthru
          _
        %s308 = sand.u32 %s30, 1
        %s309 = scalar_lea.sflag [#allocation7], %s308
        %s310 = sand.u32 %s66, 1
        %s311 = smul.addr %s310, 4
        %s312 = scalar_lea.vmem [#allocation6], %s311
        // Predicated region
        $region41: #{tpu_custom_call.1} parent=35 // pred_check
          %p313 = pneg %p79
        $region42: #{tpu_custom_call.1} parent=35 // pred_check_branch
          %315 = sbr.rel (%p313) target = $region44
        $region43: #{tpu_custom_call.1} parent=35 // pred_region
          %317 = dma.done %s309, 64
        $region44: #{tpu_custom_call.1} parent=35 // pred_fallthru
          _
        // Predicated region
        $region45: #{tpu_custom_call.1} parent=35 // pred_check
          %p318 = pneg %p100
        $region46: #{tpu_custom_call.1} parent=35 // pred_check_branch
          %320 = sbr.rel (%p318) target = $region48
        $region47: #{tpu_custom_call.1} parent=35 // pred_region
          %322 = dma.done [#allocation7], 128
        $region48: #{tpu_custom_call.1} parent=35 // pred_fallthru
          _
        %s323 = sand.u32 %s113, 1
        %s324 = scalar_lea.sflag [#allocation10], %s323
        %s325 = sand.u32 %s113, 1
        %s326 = scalar_lea.vmem [#allocation9], %s325
        // Predicated region
        $region49: #{tpu_custom_call.1} parent=35 // pred_check
          %p327 = pneg %p126
        $region50: #{tpu_custom_call.1} parent=35 // pred_check_branch
          %329 = sbr.rel (%p327) target = $region52
        $region51: #{tpu_custom_call.1} parent=35 // pred_region
          %331 = dma.done %s324, 16
        $region52: #{tpu_custom_call.1} parent=35 // pred_fallthru
          _
        %s332 = sand.u32 %s38, 1
        %s333 = scalar_lea.sflag [#allocation4], %s332
        %s334 = sand.u32 %s38, 1
        %s335 = smul.addr %s334, 4
        %s336 = scalar_lea.vmem [#allocation3], %s335
        %p337 = pneg %p51
        %p338 = pneg %p48
        %s339 = sand.u32 %s30, 1
        %s340 = scalar_lea.sflag [#allocation7], %s339
        %s341 = sand.u32 %s66, 1
        %s342 = smul.addr %s341, 4
        %s343 = scalar_lea.vmem [#allocation6], %s342
        %p344 = pneg %p79
        %p345 = pneg %p76
        %p346 = pneg %p100
        %p347 = pneg %p97
        %s348 = sand.u32 %s113, 1
        %s349 = scalar_lea.sflag [#allocation10], %s348
        %s350 = sand.u32 %s113, 1
        %s351 = scalar_lea.vmem [#allocation9], %s350
        %p352 = pneg %p126
        %p353 = pneg %p123
        %p354 = pneg %p152
        %p355 = pneg %p149
        %s356 = sand.u32 %s139, 1
        %s357 = scalar_lea.sflag [#allocation5], %s356
        %s358 = sand.u32 %s139, 1
        %s359 = smul.addr %s358, 8
        %s360 = scalar_lea.vmem [#allocation11], %s359
        %p361 = pneg %p178
        %p362 = pneg %p175
        %p363 = scmp.lt.s32.totalorder %s30, 1
        %s364 = scalar_select %p363, %s30, 1
        %s365 = smul.addr %s364, 8
        %s366 = scalar_lea.vmem %s5, %s365
        %p367 = pneg %p204
        %p368 = pneg %p201
        %p369 = scmp.lt.s32.totalorder %s30, 1
        %s370 = scalar_select %p369, %s30, 1
        %s371 = smul.addr %s370, 8
        %s372 = scalar_lea.vmem %s6, %s371
        %s373 = sadd.s32 %s30, 1
        %p374 = scmp.lt.s32.totalorder %s30, 1
        %s375 = scalar_select %p374, %s30, 1
        %s376 = smul.addr %s375, 8
        %s377 = scalar_lea.vmem %s5, %s376
        %p378 = scmp.lt.s32.totalorder %s30, 1
        %s379 = scalar_select %p378, %s30, 1
        %s380 = smul.addr %s379, 8
        %s381 = scalar_lea.vmem %s6, %s380
        %v382 = vld [vmem:[%s302] sm:$0xf]
        %383 = vst [vmem:[#allocation2] sm:$0xf] %v382
        %v384 = vld [vmem:[%s302] sm:$0xf]
        %386 = vrot.lane.b32.xlu0 %v384, 127
        %v387 = vpop.permute.xlu0 %386
        %vm389 = vcmask 1035264
        %390 = vst.msk [vmem:[#allocation2 + $0x4] sm:$0xf] %vm389, %v387
        %v391 = vld [vmem:[%s312] sm:$0xf]
        %393 = vrot.lane.b32.xlu0 %v391, 127
        %v394 = vpop.permute.xlu0 %393
        %vm396 = vcmask 1044472
        %397 = vst.msk [vmem:[#allocation2 + $0x4] sm:$0xf] %vm396, %v394
        %v398 = vld [vmem:[%s302] sm:$0xf]
        %400 = vrot.lane.b32.xlu0 %v398, 126
        %v401 = vpop.permute.xlu0 %400
        %vm403 = vcmask 1027072
        %404 = vst.msk [vmem:[#allocation2 + $0x8] sm:$0xf] %vm403, %v401
        %v405 = vld [vmem:[%s312] sm:$0xf]
        %407 = vrot.lane.b32.xlu0 %v405, 126
        %v408 = vpop.permute.xlu0 %407
        %vm410 = vcmask 1044464
        %411 = vst.msk [vmem:[#allocation2 + $0x8] sm:$0xf] %vm410, %v408
        %v412 = vld [vmem:[%s302] sm:$0xf]
        %414 = vrot.lane.b32.xlu0 %v412, 125
        %v415 = vpop.permute.xlu0 %414
        %vm417 = vcmask 1018880
        %418 = vst.msk [vmem:[#allocation2 + $0xc] sm:$0xf] %vm417, %v415
        %v419 = vld [vmem:[%s312] sm:$0xf]
        %421 = vrot.lane.b32.xlu0 %v419, 125
        %v422 = vpop.permute.xlu0 %421
        %vm424 = vcmask 1044456
        %425 = vst.msk [vmem:[#allocation2 + $0xc] sm:$0xf] %vm424, %v422
        %v426 = vld [vmem:[%s302] sm:$0xf]
        %428 = vrot.lane.b32.xlu0 %v426, 124
        %v429 = vpop.permute.xlu0 %428
        %vm431 = vcmask 1010688
        %432 = vst.msk [vmem:[#allocation2 + $0x10] sm:$0xf] %vm431, %v429
        %v433 = vld [vmem:[%s312] sm:$0xf]
        %435 = vrot.lane.b32.xlu0 %v433, 124
        %v436 = vpop.permute.xlu0 %435
        %vm438 = vcmask 1044448
        %439 = vst.msk [vmem:[#allocation2 + $0x10] sm:$0xf] %vm438, %v436
        %v440 = vld [vmem:[%s302] sm:$0xf]
        %442 = vrot.lane.b32.xlu0 %v440, 123
        %v443 = vpop.permute.xlu0 %442
        %vm445 = vcmask 1002496
        %446 = vst.msk [vmem:[#allocation2 + $0x14] sm:$0xf] %vm445, %v443
        %v447 = vld [vmem:[%s312] sm:$0xf]
        %449 = vrot.lane.b32.xlu0 %v447, 123
        %v450 = vpop.permute.xlu0 %449
        %vm452 = vcmask 1044440
        %453 = vst.msk [vmem:[#allocation2 + $0x14] sm:$0xf] %vm452, %v450
        %v454 = vld [vmem:[%s302] sm:$0xf]
        %456 = vrot.lane.b32.xlu0 %v454, 122
        %v457 = vpop.permute.xlu0 %456
        %vm459 = vcmask 994304
        %460 = vst.msk [vmem:[#allocation2 + $0x18] sm:$0xf] %vm459, %v457
        %v461 = vld [vmem:[%s312] sm:$0xf]
        %463 = vrot.lane.b32.xlu0 %v461, 122
        %v464 = vpop.permute.xlu0 %463
        %vm466 = vcmask 1044432
        %467 = vst.msk [vmem:[#allocation2 + $0x18] sm:$0xf] %vm466, %v464
        %v468 = vld [vmem:[%s302] sm:$0xf]
        %470 = vrot.lane.b32.xlu0 %v468, 121
        %v471 = vpop.permute.xlu0 %470
        %vm473 = vcmask 986112
        %474 = vst.msk [vmem:[#allocation2 + $0x1c] sm:$0xf] %vm473, %v471
        %v475 = vld [vmem:[%s312] sm:$0xf]
        %477 = vrot.lane.b32.xlu0 %v475, 121
        %v478 = vpop.permute.xlu0 %477
        %vm480 = vcmask 1044424
        %481 = vst.msk [vmem:[#allocation2 + $0x1c] sm:$0xf] %vm480, %v478
        %v482 = vld [vmem:[%s302] sm:$0xf]
        %484 = vrot.lane.b32.xlu0 %v482, 120
        %v485 = vpop.permute.xlu0 %484
        %vm487 = vcmask 977920
        %488 = vst.msk [vmem:[#allocation2 + $0x20] sm:$0xf] %vm487, %v485
        %v489 = vld [vmem:[%s312] sm:$0xf]
        %491 = vrot.lane.b32.xlu0 %v489, 120
        %v492 = vpop.permute.xlu0 %491
        %vm494 = vcmask 1044416
        %495 = vst.msk [vmem:[#allocation2 + $0x20] sm:$0xf] %vm494, %v492
        %v496 = vld [vmem:[#allocation8] sm:$0xff]
        %v497 = vld [vmem:[#allocation2] sm:$0xff]
        %v498 = vld [vmem:[#allocation2 + $0x8] sm:$0xff]
        %v499 = vld [vmem:[#allocation2 + $0x10] sm:$0xff]
        %v500 = vld [vmem:[#allocation2 + $0x18] sm:$0xff]
        %v501 = vld [vmem:[#allocation2 + $0x20] sm:$0xf]
        %vm502 = vcmask 293888
        %v504 = vsel %vm502, %v496, 0
        %vm506 = vcmask 1043456
        %v508 = vsel %vm506, %v501, 0
        %510 = vmatpush.msra.mxu0 0.0
        %511 = vmatpush.msra.mxu0 0.0
        %512 = vmatpush.msra.mxu0 0.0
        %513 = vmatpush.msra.mxu0 0.0
        %514 = vmatpush.msra.mxu0 0.0
        %515 = vmatpush.msra.mxu0 0.0
        %516 = vmatpush.msra.mxu0 0.0
        %517 = vmatpush.msra.mxu0 0.0
        %518 = vmatpush.msra.mxu0 0.0
        %519 = vmatpush.msra.mxu0 0.0
        %520 = vmatpush.msra.mxu0 0.0
        %521 = vmatpush.msra.mxu0 %v508
        %522 = vmatpush.msra.mxu0 %v500
        %523 = vmatpush.msra.mxu0 %v499
        %524 = vmatpush.msra.mxu0 %v498
        %525 = vmatpush.msra.mxu0 %v497
        %526 = vmatmul.f32.gmra.mxu0 %v504
        %v527 = vpop.f32.mrf.mxu0
        %v528 = vadd.f32 0.0, %v527
        %529 = vdwg.mxu0
        %530 = vst [vmem:[%s360] sm:$0xff] %v528
        %v531 = vld [vmem:[%s326] sm:$0x1]
        %vm532 = vcmp.gt.f32.partialorder %v531, 0.5
        %v533 = vsel %vm532, 1, 0
        %v534 = vperm.slane %v533, 0
        %vm535 = vcmp.eq.s32.totalorder %v534, 1
        %v536 = vsel %vm535, %v528, 0.0
        %537 = vadd.xlane.f32.xlu0 %v536
        %v538 = vpop.xlane.xlu0 %537
        %vm539 = vcmask 7168
        %540 = vst.msk [vmem:[%s377] sm:$0xff] %vm539, %v538
        %v541 = vmul.f32 %v536, %v536
        %542 = vadd.xlane.f32.xlu0 %v541
        %v543 = vpop.xlane.xlu0 %542
        %544 = vst.msk [vmem:[%s381] sm:$0xff] %vm539, %v543
        %s545 = sand.u32 %s139, 1
        %s546 = scalar_lea.sflag [#allocation5], %s545
        %s547 = sand.u32 %s139, 1
        %s548 = smul.addr %s547, 8
        %s549 = scalar_lea.vmem [#allocation11], %s548
        %p550 = scmp.lt.s32.totalorder %s30, 1
        %s551 = scalar_select %p550, %s30, 1
        %s552 = smul.addr %s551, 8
        %s553 = scalar_lea.vmem %s5, %s552
        %p554 = scmp.lt.s32.totalorder %s30, 1
        %s555 = scalar_select %p554, %s30, 1
        %s556 = smul.addr %s555, 8
        %s557 = scalar_lea.vmem %s6, %s556
        // Predicated region
        $region53: #{tpu_custom_call.1} parent=35 // pred_check
          %p558 = pneg %p149
        $region54: #{tpu_custom_call.1} parent=35 // pred_check_branch
          %560 = sbr.rel (%p558) target = $region56
        $region55: #{tpu_custom_call.1} parent=35 // pred_region
          %562 = vsyncadd %s546, 0
          %s563 = smul.addr %s30, 8
          %s564 = scalar_lea.hbm %s4, %s563
          %s566 = sshll.u32 %s549, 4
          %s567 = int_to_ptr.vmem [resolvable:$true] %s566
          %s568 = sshll.u32 %s564, 4
          %s569 = int_to_ptr.hbm [resolvable:$true] %s568
          %571 = dma.vmem_to_hbm [thread:$0]  %s567, 128, %s569, %s546
        $region56: #{tpu_custom_call.1} parent=35 // pred_fallthru
          _
        // Predicated region
        $region57: #{tpu_custom_call.1} parent=35 // pred_check
          %p572 = pneg %p175
        $region58: #{tpu_custom_call.1} parent=35 // pred_check_branch
          %574 = sbr.rel (%p572) target = $region60
        $region59: #{tpu_custom_call.1} parent=35 // pred_region
          _
        $region60: #{tpu_custom_call.1} parent=35 // pred_fallthru
          _
        // Predicated region
        $region61: #{tpu_custom_call.1} parent=35 // pred_check
          %p575 = pneg %p201
        $region62: #{tpu_custom_call.1} parent=35 // pred_check_branch
          %577 = sbr.rel (%p575) target = $region64
        $region63: #{tpu_custom_call.1} parent=35 // pred_region
          _
        $region64: #{tpu_custom_call.1} parent=35 // pred_fallthru
          _
      $region36: #{tpu_custom_call.1} parent=5 // pred_fallthru
        _
      %p578 = scmp.le.s32.totalorder 2, %s25
      // Predicated region
      $region65: #{tpu_custom_call.1} parent=5 // pred_check
        %p579 = pneg %p578
      $region66: #{tpu_custom_call.1} parent=5 // pred_check_branch
        %581 = sbr.rel (%p579) target = $region68
      $region67: #{tpu_custom_call.1} parent=5 // pred_region
        %s582 = ssub.s32 %s25, 2
        // Predicated region
        $region69: #{tpu_custom_call.1} parent=67 // pred_check
          %p583 = pneg %p155
        $region70: #{tpu_custom_call.1} parent=67 // pred_check_branch
          %585 = sbr.rel (%p583) target = $region72
        $region71: #{tpu_custom_call.1} parent=67 // pred_region
          %s586 = sand.u32 %s140, 1
          %s587 = scalar_lea.sflag [#allocation5], %s586
          %s588 = sand.u32 %s140, 1
          %s589 = smul.addr %s588, 8
          %s590 = scalar_lea.vmem [#allocation11], %s589
          %592 = dma.done %s587, 128
        $region72: #{tpu_custom_call.1} parent=67 // pred_fallthru
          _
        // Predicated region
        $region73: #{tpu_custom_call.1} parent=67 // pred_check
          %p593 = pneg %p181
        $region74: #{tpu_custom_call.1} parent=67 // pred_check_branch
          %595 = sbr.rel (%p593) target = $region76
        $region75: #{tpu_custom_call.1} parent=67 // pred_region
          %p596 = scmp.lt.s32.totalorder %s31, 1
          %s597 = scalar_select %p596, %s31, 1
          %s598 = smul.addr %s597, 8
          %s599 = scalar_lea.vmem %s5, %s598
        $region76: #{tpu_custom_call.1} parent=67 // pred_fallthru
          _
        // Predicated region
        $region77: #{tpu_custom_call.1} parent=67 // pred_check
          %p600 = pneg %p207
        $region78: #{tpu_custom_call.1} parent=67 // pred_check_branch
          %602 = sbr.rel (%p600) target = $region80
        $region79: #{tpu_custom_call.1} parent=67 // pred_region
          %p603 = scmp.lt.s32.totalorder %s31, 1
          %s604 = scalar_select %p603, %s31, 1
          %s605 = smul.addr %s604, 8
          %s606 = scalar_lea.vmem %s6, %s605
        $region80: #{tpu_custom_call.1} parent=67 // pred_fallthru
          _
      $region68: #{tpu_custom_call.1} parent=5 // pred_fallthru
        _
    $region6: #{tpu_custom_call.1} parent=1 // loop_footer
      %s29 = sadd.s32 1, %s25
    $region7: #{tpu_custom_call.1} parent=1 // loop_footer_branch
      %24 = sbr.rel target = $region3
    $region8: #{tpu_custom_call.1} parent=1 // loop_exit
      _
    %607 = vsyncpa [#allocation4], 1
    %s608 = scalar_lea.sflag [#allocation4], 1
    %609 = vsyncpa %s608, 1
    %610 = vsyncpa [#allocation7], 1
    %s611 = scalar_lea.sflag [#allocation7], 1
    %612 = vsyncpa %s611, 1
    %613 = vsyncpa [#allocation10], 1
    %s614 = scalar_lea.sflag [#allocation10], 1
    %615 = vsyncpa %s614, 1
    %616 = vsyncpa [#allocation5], 1
    %s617 = scalar_lea.sflag [#allocation5], 1
    %618 = vsyncpa %s617, 1

</llo_original>
